<compile_context>
chip_gen: v6e
topology: v6e:2x2x1
jax: 0.10.0
libtpu: 0.0.40
codegen_flags: <defaults>
</compile_context>

<pallas_src>
import functools

import jax
import jax.numpy as jnp
import numpy as np
from jax.experimental import pallas as pl
from jax.experimental.pallas import tpu as pltpu


def _round_up(x, m):
    return (x + m - 1) // m * m


# ----------------------------- Pallas kernels ------------------------------

def _conv1_kernel(w_ref, a_ref, b_ref, o_ref):
    # w: (12, Kp) bf16, a: (Kp, Mblk) bf16, b: (12, 1) f32
    # o: (12, Mblk) f32 = relu(w @ a + b)   -- lane-dense output
    acc = jnp.dot(w_ref[...], a_ref[...], preferred_element_type=jnp.float32)
    o_ref[...] = jnp.maximum(acc + b_ref[...], 0.0).astype(o_ref.dtype)


def conv1_gemm(w1m, a1t, b1col):
    """relu(W1 @ A1^T + b1): [Co, Kp] x [Kp, M] -> [Co, M] (lane-dense)."""
    Co, Kp = w1m.shape
    _, M = a1t.shape
    n_blk = 2 if M % 256 == 0 else 1       # 2 parallel steps -> both v7x TCs
    mb = M // n_blk
    return pl.pallas_call(
        _conv1_kernel,
        out_shape=jax.ShapeDtypeStruct((Co, M), jnp.float32),
        grid_spec=pltpu.PrefetchScalarGridSpec(
            num_scalar_prefetch=0,
            grid=(n_blk,),
            in_specs=[
                pl.BlockSpec((Co, Kp), lambda i: (0, 0)),
                pl.BlockSpec((Kp, mb), lambda i: (0, i)),
                pl.BlockSpec((Co, 1), lambda i: (0, 0)),
            ],
            out_specs=pl.BlockSpec((Co, mb), lambda i: (0, i)),
        ),
        compiler_params=pltpu.CompilerParams(
            dimension_semantics=("parallel",)),
    )(w1m, a1t, b1col)


def _conv2_pool_kernel(a_ref, w_ref, b_ref, o_ref, *, n_taps, rows_per_tap):
    # a: (n_taps*rows_per_tap, Kp) bf16, w: (Kp, Co) bf16, b: (1, Co) f32
    # A2 rows are ordered (pool_tap, n, py, px): the 3x3/stride-3 max pool is
    # a max over n_taps consecutive, sublane-aligned row chunks (f32 epilogue).
    y = jnp.dot(a_ref[...], w_ref[...], preferred_element_type=jnp.float32)
    y = jnp.maximum(y + b_ref[...], 0.0)
    pooled = y[0:rows_per_tap, :]
    for t in range(1, n_taps):
        pooled = jnp.maximum(pooled, y[t * rows_per_tap:(t + 1) * rows_per_tap, :])
    o_ref[...] = pooled.astype(o_ref.dtype)


def conv2_gemm_pool(a2, w2m, b2row, *, n_taps, pooled_rows, n_blk):
    """Fused relu(A2 @ W2 + b2) + 3x3/stride-3 max pool."""
    M2, Kp = a2.shape
    Co = w2m.shape[1]
    mb = M2 // n_blk                       # whole pool groups per grid step
    rb = pooled_rows // n_blk
    kern = functools.partial(_conv2_pool_kernel,
                             n_taps=n_taps, rows_per_tap=rb)
    return pl.pallas_call(
        kern,
        out_shape=jax.ShapeDtypeStruct((pooled_rows, Co), jnp.float32),
        grid_spec=pltpu.PrefetchScalarGridSpec(
            num_scalar_prefetch=0,
            grid=(n_blk,),
            in_specs=[
                pl.BlockSpec((mb, Kp), lambda i: (i, 0)),
                pl.BlockSpec((Kp, Co), lambda i: (0, 0)),
                pl.BlockSpec((1, Co), lambda i: (0, 0)),
            ],
            out_specs=pl.BlockSpec((rb, Co), lambda i: (i, 0)),
        ),
        compiler_params=pltpu.CompilerParams(
            dimension_semantics=("parallel",)),
    )(a2, w2m, b2row)


# ------------------------------ JAX glue -----------------------------------
# All glue is static slices / reshapes / transposes on <200 KB arrays; no
# gathers, no pads of the M dimension.

def net_e_forward(X, w1, b1, w2, b2):
    """Pallas implementation of NetE.forward.  X: [B, C, T, H, W] float32."""
    B, C, T, H, W = X.shape
    Co1, _, K1h, K1w = w1.shape            # (12, C, 5, 5)
    Co2, _, K2h, K2w = w2.shape            # (6, 12, 3, 3)
    N = B * T

    # conv / pool geometry (stride 2, dilation 2, valid; MaxPool2d(3)).
    H1 = (H - 2 * (K1h - 1) - 1) // 2 + 1
    W1 = (W - 2 * (K1w - 1) - 1) // 2 + 1
    H2 = (H1 - 2 * (K2h - 1) - 1) // 2 + 1
    W2c = (W1 - 2 * (K2w - 1) - 1) // 2 + 1
    Hp, Wp = H2 // 3, W2c // 3
    # conv1 output positions actually consumed downstream: even rows/cols only.
    H1e = 3 * Hp + K2h - 1
    W1e = 3 * Wp + K2w - 1
    assert 4 * (H1e - 1) + 2 * (K1h - 1) <= H - 1
    assert 4 * (W1e - 1) + 2 * (K1w - 1) <= W - 1

    x = X.transpose(0, 2, 1, 3, 4).reshape(N, C, H, W)   # frame-major NCHW

    # ---- conv1 im2col (static strided slices): A1T[(c,ky,kx),(n,i,j)] ------
    taps1 = jnp.stack([
        x[:, :, 2 * ky::4, 2 * kx::4][:, :, :H1e, :W1e]
        for ky in range(K1h) for kx in range(K1w)
    ])                                                   # (25, N, C, H1e, W1e)
    K1 = C * K1h * K1w
    M1 = N * H1e * W1e
    a1t = taps1.transpose(2, 0, 1, 3, 4).reshape(K1, M1)
    K1p = _round_up(K1, 16)
    a1t = jnp.pad(a1t, ((0, K1p - K1), (0, 0))).astype(jnp.bfloat16)
    w1m = jnp.pad(w1.reshape(Co1, K1),
                  ((0, 0), (0, K1p - K1))).astype(jnp.bfloat16)
    b1c = b1.reshape(Co1, 1).astype(jnp.float32)

    # ---- conv1 GEMM + bias + ReLU (Pallas, lane-dense [12, M1] output) -----
    y1 = conv1_gemm(w1m, a1t, b1c)                       # (Co1, M1) f32

    # ---- conv2 im2col from y1 (static slices) + pool-friendly row order ----
    y1_4d = y1.reshape(Co1, N, H1e, W1e)                 # (c, n, i, j)
    n_blk2 = 2 if N % 2 == 0 else 1
    taps2 = jnp.stack([
        y1_4d[:, :, ky:ky + 3 * Hp, kx:kx + 3 * Wp]
        for ky in range(K2h) for kx in range(K2w)
    ])                                                   # (9, c, n, oy, ox)
    taps2 = taps2.reshape(K2h, K2w, Co1, n_blk2, N // n_blk2, Hp, 3, Wp, 3)
    # rows: (block, dy, dx, n', py, px)    cols: (ky, kx, c)
    a2 = taps2.transpose(3, 6, 8, 4, 5, 7, 0, 1, 2).reshape(
        N * Hp * Wp * K2h * K2w, K2h * K2w * Co1)
    K2 = K2h * K2w * Co1
    K2p = _round_up(K2, 16)
    a2 = jnp.pad(a2, ((0, 0), (0, K2p - K2))).astype(jnp.bfloat16)
    w2m = jnp.pad(w2.transpose(2, 3, 1, 0).reshape(K2, Co2),
                  ((0, K2p - K2), (0, 0))).astype(jnp.bfloat16)
    b2r = b2.reshape(1, Co2).astype(jnp.float32)

    # ---- conv2 GEMM + bias + ReLU + max-pool (one fused Pallas kernel) -----
    pooled = conv2_gemm_pool(a2, w2m, b2r,
                             n_taps=K2h * K2w,
                             pooled_rows=N * Hp * Wp,
                             n_blk=n_blk2)               # (N*Hp*Wp, Co2) f32

    # ---- flatten in NCHW order, stack frames along the last axis (192 el) --
    out = pooled.reshape(B, T, Hp, Wp, Co2).transpose(0, 4, 2, 3, 1)
    return out.reshape(B, Co2 * Hp * Wp, T)


# --------------------------- reference (XLA, f32) ---------------------------

def ref_forward(X, w1, b1, w2, b2):
    B, C, T, H, W = X.shape
    dn = ('NCHW', 'OIHW', 'NCHW')
    outs = []
    for t in range(T):
        x = X[:, :, t]
        y = jax.lax.conv_general_dilated(x, w1, (2, 2), 'VALID',
                                         rhs_dilation=(2, 2),
                                         dimension_numbers=dn)
        y = jnp.maximum(y + b1[None, :, None, None], 0.0)
        z = jax.lax.conv_general_dilated(y, w2, (2, 2), 'VALID',
                                         rhs_dilation=(2, 2),
                                         dimension_numbers=dn)
        z = jnp.maximum(z + b2[None, :, None, None], 0.0)
        z = jax.lax.reduce_window(z, -jnp.inf, jax.lax.max,
                                  (1, 1, 3, 3), (1, 1, 3, 3), 'VALID')
        outs.append(z.reshape(B, -1))
    return jnp.stack(outs, axis=2)


# ------------------------------- main ---------------------------------------

if __name__ == "__main__":
    key = jax.random.PRNGKey(0)
    kx, k1, k2, k3, k4 = jax.random.split(key, 5)

    B, Cin, T, H, W = 2, 3, 4, 40, 40
    X = jax.random.normal(kx, (B, Cin, T, H, W), dtype=jnp.float32)

    # Deterministic synthetic parameters (shapes from NetE.__init__).
    w1 = 0.1 * jax.random.normal(k1, (12, Cin, 5, 5), dtype=jnp.float32)
    b1 = 0.1 * jax.random.normal(k2, (12,), dtype=jnp.float32)
    w2 = 0.1 * jax.random.normal(k3, (6, 12, 3, 3), dtype=jnp.float32)
    b2 = 0.1 * jax.random.normal(k4, (6,), dtype=jnp.float32)

    fwd = jax.jit(net_e_forward)
    out = jax.block_until_ready(fwd(X, w1, b1, w2, b2))
    ref = jax.block_until_ready(ref_forward(X, w1, b1, w2, b2))

    assert out.shape == (B, 6 * 2 * 2, T), out.shape
    # bf16 MXU inputs with f32 accumulation vs. pure-f32 reference: tolerance
    # sized for bf16 product rounding over K<=112 (errors observed ~1e-2).
    np.testing.assert_allclose(np.asarray(out), np.asarray(ref),
                               rtol=5e-2, atol=5e-2)
    print("KERNEL_OK")
</pallas_src>

<mosaic_0001>
module attributes {stable_mosaic.version = 11 : i64} {
  func.func @_conv1_kernel(%arg0: i32, %arg1: memref<12x80xbf16, #tpu.memory_space<vmem>>, %arg2: memref<80x256xbf16, #tpu.memory_space<vmem>>, %arg3: memref<12x1xf32, #tpu.memory_space<vmem>>, %arg4: memref<12x256xf32, #tpu.memory_space<vmem>>) attributes {dimension_semantics = [#tpu.dimension_semantics<parallel>], iteration_bounds = array<i64: 2>, scalar_prefetch = 0 : i64, scratch_operands = 0 : i64, tpu.core_type = #tpu.core_type<tc>, window_params = [{pipeline_mode = #tpu.pipeline_mode<synchronous>, transform_indices = @transform_0, window_bounds = array<i64: 12, 80>}, {transform_indices = @transform_1, window_bounds = array<i64: 80, 256>}, {pipeline_mode = #tpu.pipeline_mode<synchronous>, transform_indices = @transform_2, window_bounds = array<i64: 12, 1>}, {transform_indices = @transform_3, window_bounds = array<i64: 12, 256>}]} {
    %c0 = arith.constant 0 : index
    %c0_0 = arith.constant 0 : index
    %0 = vector.load %arg1[%c0, %c0_0] : memref<12x80xbf16, #tpu.memory_space<vmem>>, vector<12x80xbf16>
    %c0_1 = arith.constant 0 : index
    %c0_2 = arith.constant 0 : index
    %1 = vector.load %arg2[%c0_1, %c0_2] : memref<80x256xbf16, #tpu.memory_space<vmem>>, vector<80x256xbf16>
    %cst = arith.constant dense<0.000000e+00> : vector<12x256xf32>
    %2 = tpu.matmul %0, %1, %cst {dimension_numbers = #tpu.dot_dimension_numbers<[1], [0], [0], [1], [0, 0, 1, 1], [], []>} : vector<12x80xbf16>, vector<80x256xbf16>, vector<12x256xf32> -> vector<12x256xf32>
    %c0_3 = arith.constant 0 : index
    %c0_4 = arith.constant 0 : index
    %3 = vector.load %arg3[%c0_3, %c0_4] : memref<12x1xf32, #tpu.memory_space<vmem>>, vector<12x1xf32>
    %4 = vector.broadcast %3 : vector<12x1xf32> to vector<12x256xf32>
    %5 = arith.addf %2, %4 : vector<12x256xf32>
    %cst_5 = arith.constant 0.000000e+00 : f32
    %6 = vector.broadcast %cst_5 : f32 to vector<12x256xf32>
    %7 = arith.maximumf %5, %6 : vector<12x256xf32>
    %c0_6 = arith.constant 0 : index
    %c0_7 = arith.constant 0 : index
    %8 = vector.load %arg4[%c0_6, %c0_7] : memref<12x256xf32, #tpu.memory_space<vmem>>, vector<12x256xf32>
    tpu.vector_store %arg4[%c0_6, %c0_7], %7 {strides = array<i32>} : memref<12x256xf32, #tpu.memory_space<vmem>>, vector<12x256xf32>,
    return
  }
  func.func @transform_0(%arg0: i32) -> (i32, i32) {
    %c0_i32 = arith.constant 0 : i32
    %c0_i32_0 = arith.constant 0 : i32
    %c0_i32_1 = arith.constant 0 : i32
    return %c0_i32, %c0_i32_0 : i32, i32
  }
  func.func @transform_1(%arg0: i32) -> (i32, i32) {
    %c0_i32 = arith.constant 0 : i32
    %c0_i32_0 = arith.constant 0 : i32
    return %c0_i32, %arg0 : i32, i32
  }
  func.func @transform_2(%arg0: i32) -> (i32, i32) {
    %c0_i32 = arith.constant 0 : i32
    %c0_i32_0 = arith.constant 0 : i32
    %c0_i32_1 = arith.constant 0 : i32
    return %c0_i32, %c0_i32_0 : i32, i32
  }
  func.func @transform_3(%arg0: i32) -> (i32, i32) {
    %c0_i32 = arith.constant 0 : i32
    %c0_i32_0 = arith.constant 0 : i32
    return %c0_i32, %arg0 : i32, i32
  }
}

module attributes {stable_mosaic.version = 11 : i64} {
  func.func @_conv2_pool_kernel(%arg0: i32, %arg1: memref<144x112xbf16, #tpu.memory_space<vmem>>, %arg2: memref<112x6xbf16, #tpu.memory_space<vmem>>, %arg3: memref<1x6xf32, #tpu.memory_space<vmem>>, %arg4: memref<16x6xf32, #tpu.memory_space<vmem>>) attributes {dimension_semantics = [#tpu.dimension_semantics<parallel>], iteration_bounds = array<i64: 2>, scalar_prefetch = 0 : i64, scratch_operands = 0 : i64, tpu.core_type = #tpu.core_type<tc>, window_params = [{transform_indices = @transform_0, window_bounds = array<i64: 144, 112>}, {pipeline_mode = #tpu.pipeline_mode<synchronous>, transform_indices = @transform_1, window_bounds = array<i64: 112, 6>}, {pipeline_mode = #tpu.pipeline_mode<synchronous>, transform_indices = @transform_2, window_bounds = array<i64: 1, 6>}, {transform_indices = @transform_3, window_bounds = array<i64: 16, 6>}]} {
    %c0 = arith.constant 0 : index
    %c0_0 = arith.constant 0 : index
    %0 = vector.load %arg1[%c0, %c0_0] : memref<144x112xbf16, #tpu.memory_space<vmem>>, vector<144x112xbf16>
    %c0_1 = arith.constant 0 : index
    %c0_2 = arith.constant 0 : index
    %1 = vector.load %arg2[%c0_1, %c0_2] : memref<112x6xbf16, #tpu.memory_space<vmem>>, vector<112x6xbf16>
    %cst = arith.constant dense<0.000000e+00> : vector<144x6xf32>
    %2 = tpu.matmul %0, %1, %cst {dimension_numbers = #tpu.dot_dimension_numbers<[1], [0], [0], [1], [0, 0, 1, 1], [], []>} : vector<144x112xbf16>, vector<112x6xbf16>, vector<144x6xf32> -> vector<144x6xf32>
    %c0_3 = arith.constant 0 : index
    %c0_4 = arith.constant 0 : index
    %3 = vector.load %arg3[%c0_3, %c0_4] : memref<1x6xf32, #tpu.memory_space<vmem>>, vector<1x6xf32>
    %4 = vector.broadcast %3 : vector<1x6xf32> to vector<144x6xf32>
    %5 = arith.addf %2, %4 : vector<144x6xf32>
    %cst_5 = arith.constant 0.000000e+00 : f32
    %6 = vector.broadcast %cst_5 : f32 to vector<144x6xf32>
    %7 = arith.maximumf %5, %6 : vector<144x6xf32>
    %8 = vector.extract_strided_slice %7 {offsets = [0, 0], sizes = [16, 6], strides = [1, 1]} : vector<144x6xf32> to vector<16x6xf32>
    %9 = vector.extract_strided_slice %7 {offsets = [16, 0], sizes = [16, 6], strides = [1, 1]} : vector<144x6xf32> to vector<16x6xf32>
    %10 = arith.maximumf %8, %9 : vector<16x6xf32>
    %11 = vector.extract_strided_slice %7 {offsets = [32, 0], sizes = [16, 6], strides = [1, 1]} : vector<144x6xf32> to vector<16x6xf32>
    %12 = arith.maximumf %10, %11 : vector<16x6xf32>
    %13 = vector.extract_strided_slice %7 {offsets = [48, 0], sizes = [16, 6], strides = [1, 1]} : vector<144x6xf32> to vector<16x6xf32>
    %14 = arith.maximumf %12, %13 : vector<16x6xf32>
    %15 = vector.extract_strided_slice %7 {offsets = [64, 0], sizes = [16, 6], strides = [1, 1]} : vector<144x6xf32> to vector<16x6xf32>
    %16 = arith.maximumf %14, %15 : vector<16x6xf32>
    %17 = vector.extract_strided_slice %7 {offsets = [80, 0], sizes = [16, 6], strides = [1, 1]} : vector<144x6xf32> to vector<16x6xf32>
    %18 = arith.maximumf %16, %17 : vector<16x6xf32>
    %19 = vector.extract_strided_slice %7 {offsets = [96, 0], sizes = [16, 6], strides = [1, 1]} : vector<144x6xf32> to vector<16x6xf32>
    %20 = arith.maximumf %18, %19 : vector<16x6xf32>
    %21 = vector.extract_strided_slice %7 {offsets = [112, 0], sizes = [16, 6], strides = [1, 1]} : vector<144x6xf32> to vector<16x6xf32>
    %22 = arith.maximumf %20, %21 : vector<16x6xf32>
    %23 = vector.extract_strided_slice %7 {offsets = [128, 0], sizes = [16, 6], strides = [1, 1]} : vector<144x6xf32> to vector<16x6xf32>
    %24 = arith.maximumf %22, %23 : vector<16x6xf32>
    %c0_6 = arith.constant 0 : index
    %c0_7 = arith.constant 0 : index
    %25 = vector.load %arg4[%c0_6, %c0_7] : memref<16x6xf32, #tpu.memory_space<vmem>>, vector<16x6xf32>
    tpu.vector_store %arg4[%c0_6, %c0_7], %24 {strides = array<i32>} : memref<16x6xf32, #tpu.memory_space<vmem>>, vector<16x6xf32>,
    return
  }
  func.func @transform_0(%arg0: i32) -> (i32, i32) {
    %c0_i32 = arith.constant 0 : i32
    %c0_i32_0 = arith.constant 0 : i32
    return %arg0, %c0_i32 : i32, i32
  }
  func.func @transform_1(%arg0: i32) -> (i32, i32) {
    %c0_i32 = arith.constant 0 : i32
    %c0_i32_0 = arith.constant 0 : i32
    %c0_i32_1 = arith.constant 0 : i32
    return %c0_i32, %c0_i32_0 : i32, i32
  }
  func.func @transform_2(%arg0: i32) -> (i32, i32) {
    %c0_i32 = arith.constant 0 : i32
    %c0_i32_0 = arith.constant 0 : i32
    %c0_i32_1 = arith.constant 0 : i32
    return %c0_i32, %c0_i32_0 : i32, i32
  }
  func.func @transform_3(%arg0: i32) -> (i32, i32) {
    %c0_i32 = arith.constant 0 : i32
    %c0_i32_0 = arith.constant 0 : i32
    return %arg0, %c0_i32 : i32, i32
  }
}

</mosaic_0001>

<llo_original>
// kernel: net_e_forward.2
$region0: #{net_e_forward.2}
  #allocation0 [shape = 'u32[]', space=smem, size = 0x4, offset = 0x4, fixed_abs, tag = 'smem constant byte address 0x4 - core index']
  #allocation1 [shape = 'u32[144,128]{1,0:T(1,128)}', space=vmem, size = 0x12000, scoped, tag = 'internal scratch']
  %s0 = inlined_call_operand.vmem [shape: bf16[12,80], index: 0, kind: input, shape index: {}]
  %s1 = inlined_call_operand.vmem [shape: bf16[80,512], index: 1, kind: input, shape index: {}]
  %s2 = inlined_call_operand.vmem [shape: f32[12,1], index: 2, kind: input, shape index: {}]
  %s3 = inlined_call_operand.vmem [shape: f32[12,512], index: 3, kind: output, shape index: {}]
  %s4 = sld [smem:[#allocation0]]
  $region102: #{net_e_forward.2} parent=0
    _
  %s6 = ssub.s32 1, %s4
  %s7 = scalar_select 0, %s6, %s4
  $region1: #{net_e_forward.2} parent=0
    #allocation2 [shape = 'u8[81920]{0}', space=vmem, size = 0x14000, scoped, tag = 'input window, operand 1']
    #allocation3 [shape = 'u8[32768]{0}', space=vmem, size = 0x8000, scoped, tag = 'output window, operand 0']
    loop: start=0, step=1, limit=4
    $region2: #{net_e_forward.2} parent=1 // loop_pre_header
      _
    $region3: #{net_e_forward.2} parent=1 // loop_header
      %s9 = sphi 0, %s13
      %p10 = scmp.ge.s32.totalorder %s9, 4
      %s17 = sphi 0, %s17
      %s19 = sphi 0, %s17
      %s20 = sphi 0, %s19
      %s34 = sphi 0, %s20
      %s40 = sphi 0, %s42
      %s43 = sphi 0, %s40
      %s44 = sphi 0, %s43
      %s60 = sphi 0, %s44
      %s64 = sphi 0, %s64
      %s66 = sphi 0, %s64
      %s67 = sphi 0, %s66
      %s81 = sphi 0, %s67
      %s87 = sphi 0, %s89
      %s90 = sphi 0, %s87
      %s91 = sphi 0, %s90
      %s107 = sphi 0, %s91
    $region4: #{net_e_forward.2} parent=1 // loop_header_branch
      %12 = sbr.rel (%p10) target = $region8
    $region5: #{net_e_forward.2} parent=1 // loop_body
      %s14 = ssub.s32 %s9, 1
      %s15 = ssub.s32 %s9, 2
      %s16 = sadd.s32 %s9, 1
      %s18 = sadd.s32 %s17, 1
      %p21 = scmp.eq.s32.totalorder %s9, 1
      %p22 = scmp.ne.s32.totalorder %s17, %s19
      %p23 = scmp.eq.s32.totalorder %s9, 0
      %p24 = por %p22, %p23
      %p25 = scmp.ne.s32.totalorder %s17, %s19
      %p26 = scmp.eq.s32.totalorder %s14, 1
      %p27 = por %p25, %p26
      %p28 = scmp.ne.s32.totalorder %s19, %s20
      %p29 = scmp.eq.s32.totalorder %s14, 0
      %p30 = por %p28, %p29
      %p31 = scmp.ne.s32.totalorder %s19, %s20
      %p32 = scmp.eq.s32.totalorder %s15, 1
      %p33 = por %p31, %p32
      %p35 = scmp.ne.s32.totalorder %s20, %s34
      %p36 = scmp.eq.s32.totalorder %s15, 0
      %p37 = por %p35, %p36
      %s38 = ssub.s32 %s9, %s16
      %p39 = scmp.eq.s32.totalorder %s38, 0
      %s41 = sadd.s32 %s40, 1
      %s42 = scalar_select %p39, %s40, %s41
      %p45 = pneg %p39
      %p46 = scmp.eq.s32.totalorder %s9, 1
      %p47 = por %p45, %p46
      %p48 = scmp.ne.s32.totalorder %s40, %s43
      %p49 = scmp.eq.s32.totalorder %s9, 0
      %p50 = por %p48, %p49
      %p51 = scmp.ne.s32.totalorder %s40, %s43
      %p52 = scmp.eq.s32.totalorder %s14, 1
      %p53 = por %p51, %p52
      %p54 = scmp.ne.s32.totalorder %s43, %s44
      %p55 = scmp.eq.s32.totalorder %s14, 0
      %p56 = por %p54, %p55
      %p57 = scmp.ne.s32.totalorder %s43, %s44
      %p58 = scmp.eq.s32.totalorder %s15, 1
      %p59 = por %p57, %p58
      %p61 = scmp.ne.s32.totalorder %s44, %s60
      %p62 = scmp.eq.s32.totalorder %s15, 0
      %p63 = por %p61, %p62
      %s65 = sadd.s32 %s64, 1
      %p68 = scmp.eq.s32.totalorder %s9, 1
      %p69 = scmp.ne.s32.totalorder %s64, %s66
      %p70 = scmp.eq.s32.totalorder %s9, 0
      %p71 = por %p69, %p70
      %p72 = scmp.ne.s32.totalorder %s64, %s66
      %p73 = scmp.eq.s32.totalorder %s14, 1
      %p74 = por %p72, %p73
      %p75 = scmp.ne.s32.totalorder %s66, %s67
      %p76 = scmp.eq.s32.totalorder %s14, 0
      %p77 = por %p75, %p76
      %p78 = scmp.ne.s32.totalorder %s66, %s67
      %p79 = scmp.eq.s32.totalorder %s15, 1
      %p80 = por %p78, %p79
      %p82 = scmp.ne.s32.totalorder %s67, %s81
      %p83 = scmp.eq.s32.totalorder %s15, 0
      %p84 = por %p82, %p83
      %s85 = ssub.s32 %s9, %s16
      %p86 = scmp.eq.s32.totalorder %s85, 0
      %s88 = sadd.s32 %s87, 1
      %s89 = scalar_select %p86, %s87, %s88
      %p92 = pneg %p86
      %p93 = scmp.eq.s32.totalorder %s9, 1
      %p94 = por %p92, %p93
      %p95 = scmp.ne.s32.totalorder %s87, %s90
      %p96 = scmp.eq.s32.totalorder %s9, 0
      %p97 = por %p95, %p96
      %p98 = scmp.ne.s32.totalorder %s87, %s90
      %p99 = scmp.eq.s32.totalorder %s14, 1
      %p100 = por %p98, %p99
      %p101 = scmp.ne.s32.totalorder %s90, %s91
      %p102 = scmp.eq.s32.totalorder %s14, 0
      %p103 = por %p101, %p102
      %p104 = scmp.ne.s32.totalorder %s90, %s91
      %p105 = scmp.eq.s32.totalorder %s15, 1
      %p106 = por %p104, %p105
      %p108 = scmp.ne.s32.totalorder %s91, %s107
      %p109 = scmp.eq.s32.totalorder %s15, 0
      %p110 = por %p108, %p109
      %p111 = scmp.le.s32.totalorder 1, %s9
      %p112 = scmp.lt.s32.totalorder %s9, 3
      %p113 = pnand %p111, %p112
      %p114 = pneg %p113
      // Predicated region
      $region9: #{net_e_forward.2} parent=5 // pred_check
        _
      $region10: #{net_e_forward.2} parent=5 // pred_check_branch
        %116 = sbr.rel (%p113) target = $region12
      $region11: #{net_e_forward.2} parent=5 // pred_region
        %s117 = ssub.s32 %s9, 1
        // Predicated region
        $region13: #{net_e_forward.2} parent=11 // pred_check
          %p118 = pneg %p30
        $region14: #{net_e_forward.2} parent=11 // pred_check_branch
          %120 = sbr.rel (%p118) target = $region16
        $region15: #{net_e_forward.2} parent=11 // pred_region
          _
        $region16: #{net_e_forward.2} parent=11 // pred_fallthru
          _
        // Predicated region
        $region17: #{net_e_forward.2} parent=11 // pred_check
          %p121 = pneg %p77
        $region18: #{net_e_forward.2} parent=11 // pred_check_branch
          %123 = sbr.rel (%p121) target = $region20
        $region19: #{net_e_forward.2} parent=11 // pred_region
          _
        $region20: #{net_e_forward.2} parent=11 // pred_fallthru
          _
      $region12: #{net_e_forward.2} parent=5 // pred_fallthru
        _
      %p124 = scmp.lt.s32.totalorder %s9, 2
      // Predicated region
      $region21: #{net_e_forward.2} parent=5 // pred_check
        %p125 = pneg %p124
      $region22: #{net_e_forward.2} parent=5 // pred_check_branch
        %127 = sbr.rel (%p125) target = $region24
      $region23: #{net_e_forward.2} parent=5 // pred_region
        // Predicated region
        $region25: #{net_e_forward.2} parent=23 // pred_check
          %p128 = pneg %p50
        $region26: #{net_e_forward.2} parent=23 // pred_check_branch
          %130 = sbr.rel (%p128) target = $region28
        $region27: #{net_e_forward.2} parent=23 // pred_region
          %s131 = sand.u32 %s40, 1
          %s132 = sand.u32 %s40, 1
          %s133 = smul.addr %s132, 80
          %s134 = scalar_lea.vmem [#allocation2], %s133
          %s135 = smul.u32 2, %s9
          %s136 = smul.addr %s135, 4
          %s137 = scalar_lea.vmem %s1, %s136
          // Predicated region
          $region29: #{net_e_forward.2} parent=27 // pred_check
            _
          $region30: #{net_e_forward.2} parent=27 // pred_check_branch
            %139 = sbr.rel (0) target = $region32
          $region31: #{net_e_forward.2} parent=27 // pred_region
            // Predicated region
            $region33: #{net_e_forward.2} parent=31 // pred_check
              _
            $region34: #{net_e_forward.2} parent=31 // pred_check_branch
              %141 = sbr.rel (0) target = $region36
            $region35: #{net_e_forward.2} parent=31 // pred_region
              // Predicated region
              $region48: #{net_e_forward.2} parent=35 // pred_check
                _
              $region49: #{net_e_forward.2} parent=35 // pred_check_branch
                %175 = sbr.rel (0) target = $region51
              $region50: #{net_e_forward.2} parent=35 // pred_region
                loop: start=0, step=1, limit=1
                $region52: #{net_e_forward.2} parent=50 // loop_pre_header
                  _
                $region53: #{net_e_forward.2} parent=50 // loop_header
                  %s177 = sphi 0, %s181
                  %p178 = scmp.ge.s32.totalorder %s177, 1
                  %s182 = sphi %s137, %s137
                  %s183 = sphi %s134, %s134
                $region54: #{net_e_forward.2} parent=50 // loop_header_branch
                  %180 = sbr.rel (%p178) target = $region58
                $region55: #{net_e_forward.2} parent=50 // loop_body
                  %v184 = vld [vmem:[%s182] sm:$0xff]
                  %185 = vst [vmem:[%s183] sm:$0xff] %v184
                  %v186 = vld [vmem:[%s182 + $0x10] sm:$0xff]
                  %187 = vst [vmem:[%s183 + $0x8] sm:$0xff] %v186
                  %v188 = vld [vmem:[%s182 + $0x20] sm:$0xff]
                  %189 = vst [vmem:[%s183 + $0x10] sm:$0xff] %v188
                  %v190 = vld [vmem:[%s182 + $0x30] sm:$0xff]
                  %191 = vst [vmem:[%s183 + $0x18] sm:$0xff] %v190
                  %v192 = vld [vmem:[%s182 + $0x40] sm:$0xff]
                  %193 = vst [vmem:[%s183 + $0x20] sm:$0xff] %v192
                  %v194 = vld [vmem:[%s182 + $0x50] sm:$0xff]
                  %195 = vst [vmem:[%s183 + $0x28] sm:$0xff] %v194
                  %v196 = vld [vmem:[%s182 + $0x60] sm:$0xff]
                  %197 = vst [vmem:[%s183 + $0x30] sm:$0xff] %v196
                  %v198 = vld [vmem:[%s182 + $0x70] sm:$0xff]
                  %199 = vst [vmem:[%s183 + $0x38] sm:$0xff] %v198
                  %v200 = vld [vmem:[%s182 + $0x80] sm:$0xff]
                  %201 = vst [vmem:[%s183 + $0x40] sm:$0xff] %v200
                  %v202 = vld [vmem:[%s182 + $0x90] sm:$0xff]
                  %203 = vst [vmem:[%s183 + $0x48] sm:$0xff] %v202
                $region56: #{net_e_forward.2} parent=50 // loop_footer
                  %s181 = sadd.s32 1, %s177
                $region57: #{net_e_forward.2} parent=50 // loop_footer_branch
                  %176 = sbr.rel target = $region53
                $region58: #{net_e_forward.2} parent=50 // loop_exit
                  _
              $region51: #{net_e_forward.2} parent=35 // pred_fallthru
                _
              // Predicated region
              $region59: #{net_e_forward.2} parent=35 // pred_check
                _
              $region60: #{net_e_forward.2} parent=35 // pred_check_branch
                %205 = sbr.rel target = $region62
              $region61: #{net_e_forward.2} parent=35 // pred_region
                _
              $region62: #{net_e_forward.2} parent=35 // pred_fallthru
                _
            $region36: #{net_e_forward.2} parent=31 // pred_fallthru
              _
            // Predicated region
            $region37: #{net_e_forward.2} parent=31 // pred_check
              _
            $region38: #{net_e_forward.2} parent=31 // pred_check_branch
              %143 = sbr.rel target = $region40
            $region39: #{net_e_forward.2} parent=31 // pred_region
              %s145 = ssub.s32 256, 1
              loop: start=0, step=1, limit=1
              $region41: #{net_e_forward.2} parent=39 // loop_pre_header
                _
              $region42: #{net_e_forward.2} parent=39 // loop_header
                %s147 = sphi 0, %s151
                %p148 = scmp.ge.s32.totalorder %s147, 1
                %s152 = sphi %s137, %s137
                %s153 = sphi %s134, %s134
              $region43: #{net_e_forward.2} parent=39 // loop_header_branch
                %150 = sbr.rel (%p148) target = $region47
              $region44: #{net_e_forward.2} parent=39 // loop_body
                %v154 = vld [vmem:[%s152] sm:%s145]
                %155 = vst [vmem:[%s153] sm:%s145] %v154
                %v156 = vld [vmem:[%s152 + $0x10] sm:%s145]
                %157 = vst [vmem:[%s153 + $0x8] sm:%s145] %v156
                %v158 = vld [vmem:[%s152 + $0x20] sm:%s145]
                %159 = vst [vmem:[%s153 + $0x10] sm:%s145] %v158
                %v160 = vld [vmem:[%s152 + $0x30] sm:%s145]
                %161 = vst [vmem:[%s153 + $0x18] sm:%s145] %v160
                %v162 = vld [vmem:[%s152 + $0x40] sm:%s145]
                %163 = vst [vmem:[%s153 + $0x20] sm:%s145] %v162
                %v164 = vld [vmem:[%s152 + $0x50] sm:%s145]
                %165 = vst [vmem:[%s153 + $0x28] sm:%s145] %v164
                %v166 = vld [vmem:[%s152 + $0x60] sm:%s145]
                %167 = vst [vmem:[%s153 + $0x30] sm:%s145] %v166
                %v168 = vld [vmem:[%s152 + $0x70] sm:%s145]
                %169 = vst [vmem:[%s153 + $0x38] sm:%s145] %v168
                %v170 = vld [vmem:[%s152 + $0x80] sm:%s145]
                %171 = vst [vmem:[%s153 + $0x40] sm:%s145] %v170
                %v172 = vld [vmem:[%s152 + $0x90] sm:%s145]
                %173 = vst [vmem:[%s153 + $0x48] sm:%s145] %v172
              $region45: #{net_e_forward.2} parent=39 // loop_footer
                %s151 = sadd.s32 1, %s147
              $region46: #{net_e_forward.2} parent=39 // loop_footer_branch
                %146 = sbr.rel target = $region42
              $region47: #{net_e_forward.2} parent=39 // loop_exit
                _
            $region40: #{net_e_forward.2} parent=31 // pred_fallthru
              _
          $region32: #{net_e_forward.2} parent=27 // pred_fallthru
            _
          %206 = vnop
        $region28: #{net_e_forward.2} parent=23 // pred_fallthru
          _
      $region24: #{net_e_forward.2} parent=5 // pred_fallthru
        _
      %p207 = scmp.le.s32.totalorder 1, %s9
      %p208 = scmp.lt.s32.totalorder %s9, 3
      %p209 = pnand %p207, %p208
      %p210 = pneg %p209
      // Predicated region
      $region63: #{net_e_forward.2} parent=5 // pred_check
        _
      $region64: #{net_e_forward.2} parent=5 // pred_check_branch
        %212 = sbr.rel (%p209) target = $region66
      $region65: #{net_e_forward.2} parent=5 // pred_region
        %s213 = ssub.s32 %s9, 1
        %s214 = sand.u32 %s43, 1
        %s215 = sand.u32 %s43, 1
        %s216 = smul.addr %s215, 80
        %s217 = scalar_lea.vmem [#allocation2], %s216
        // Predicated region
        $region67: #{net_e_forward.2} parent=65 // pred_check
          %p218 = pneg %p56
        $region68: #{net_e_forward.2} parent=65 // pred_check_branch
          %220 = sbr.rel (%p218) target = $region70
        $region69: #{net_e_forward.2} parent=65 // pred_region
          _
        $region70: #{net_e_forward.2} parent=65 // pred_fallthru
          _
        %p221 = pneg %p30
        %p222 = pneg %p27
        %s223 = sand.u32 %s43, 1
        %s224 = sand.u32 %s43, 1
        %s225 = smul.addr %s224, 80
        %s226 = scalar_lea.vmem [#allocation2], %s225
        %p227 = pneg %p56
        %p228 = pneg %p53
        %p229 = pneg %p77
        %p230 = pneg %p74
        %p231 = pneg %p103
        %p232 = pneg %p100
        %s233 = sand.u32 %s90, 1
        %s234 = sand.u32 %s90, 1
        %s235 = smul.addr %s234, 32
        %s236 = scalar_lea.vmem [#allocation3], %s235
        %s237 = smul.u32 2, %s14
        %s238 = smul.u32 2, %s14
        %v240 = vld [vmem:[%s0] sm:$0xf]
        %v241 = vld [vmem:[%s0 + $0x4] sm:$0x3]
        %v242 = vld [vmem:[%s217] sm:$0xff]
        %v243 = vld [vmem:[%s217 + $0x8] sm:$0xff]
        %v244 = vld [vmem:[%s217 + $0x10] sm:$0xff]
        %v245 = vld [vmem:[%s217 + $0x18] sm:$0xff]
        %v246 = vld [vmem:[%s217 + $0x20] sm:$0xff]
        %v247 = vld [vmem:[%s217 + $0x28] sm:$0xff]
        %v248 = vld [vmem:[%s217 + $0x30] sm:$0xff]
        %v249 = vld [vmem:[%s217 + $0x38] sm:$0xff]
        %v250 = vld [vmem:[%s217 + $0x40] sm:$0xff]
        %v251 = vld [vmem:[%s217 + $0x48] sm:$0xff]
        %v252 = vld [vmem:[%s2] sm:$0xff]
        %v253 = vld [vmem:[%s2 + $0x8] sm:$0xf]
        %255 = vset.pattern.permute.xlu0 0
        %256 = vperm.xlu0 %255, %v252
        %v257 = vpop.permute.xlu0 %256
        %260 = vset.pattern.permute.xlu0 0
        %261 = vperm.xlu0 %260, %v253
        %v262 = vpop.permute.xlu0 %261
        %v266 = vunpack.c.l.b16 %v240
        %v267 = vunpack.c.l.b16 %v241
        %v268 = vpack.c.b16 %v267, %v266
        %v279 = vunpack.c.l.b16 %v242
        %v280 = vunpack.c.h.b16 %v242
        %v281 = vunpack.c.l.b16 %v243
        %v282 = vunpack.c.h.b16 %v243
        %v283 = vunpack.c.l.b16 %v244
        %v284 = vunpack.c.h.b16 %v244
        %v285 = vunpack.c.l.b16 %v245
        %v286 = vunpack.c.h.b16 %v245
        %v287 = vunpack.c.l.b16 %v246
        %v288 = vunpack.c.h.b16 %v246
        %v289 = vunpack.c.l.b16 %v247
        %v290 = vunpack.c.h.b16 %v247
        %v291 = vunpack.c.l.b16 %v248
        %v292 = vunpack.c.h.b16 %v248
        %v293 = vunpack.c.l.b16 %v249
        %v294 = vunpack.c.h.b16 %v249
        %v295 = vunpack.c.l.b16 %v250
        %v296 = vunpack.c.h.b16 %v250
        %v297 = vunpack.c.l.b16 %v251
        %v298 = vunpack.c.h.b16 %v251
        %v299 = vpack.c.b16 %v281, %v279
        %v300 = vpack.c.b16 %v282, %v280
        %v301 = vpack.c.b16 %v285, %v283
        %v302 = vpack.c.b16 %v286, %v284
        %v303 = vpack.c.b16 %v289, %v287
        %v304 = vpack.c.b16 %v290, %v288
        %v305 = vpack.c.b16 %v293, %v291
        %v306 = vpack.c.b16 %v294, %v292
        %v307 = vpack.c.b16 %v297, %v295
        %v308 = vpack.c.b16 %v298, %v296
        %vm319 = vcmask 654336
        %v321 = vsel %vm319, %v268, 0
        %323 = vmatprep.subr.bf16.mxu0 0
        %324 = vmatpush1.bf16.msra.mxu0 0
        %325 = vmatprep.subr.bf16.mxu0 0
        %326 = vmatpush1.bf16.msra.mxu0 0
        %327 = vmatprep.subr.bf16.mxu0 0
        %328 = vmatpush1.bf16.msra.mxu0 0
        %329 = vmatprep.subr.bf16.mxu0 %v308
        %330 = vmatpush1.bf16.msra.mxu0 %v307
        %331 = vmatprep.subr.bf16.mxu0 %v306
        %332 = vmatpush1.bf16.msra.mxu0 %v305
        %333 = vmatprep.subr.bf16.mxu0 %v304
        %334 = vmatpush1.bf16.msra.mxu0 %v303
        %335 = vmatprep.subr.bf16.mxu0 %v302
        %336 = vmatpush1.bf16.msra.mxu0 %v301
        %337 = vmatprep.subr.bf16.mxu0 %v300
        %338 = vmatpush1.bf16.msra.mxu0 %v299
        %339 = vmatprep.subr.bf16.mxu0 0
        %340 = vmatpush2.bf16.msra.mxu0 0
        %341 = vmatprep.subr.bf16.mxu0 0
        %342 = vmatpush2.bf16.msra.mxu0 0
        %343 = vmatprep.subr.bf16.mxu0 0
        %344 = vmatpush2.bf16.msra.mxu0 0
        %345 = vmatprep.subr.bf16.mxu0 0
        %346 = vmatpush2.bf16.msra.mxu0 0
        %347 = vmatprep.subr.bf16.mxu0 0
        %348 = vmatpush2.bf16.msra.mxu0 0
        %349 = vmatprep.subr.bf16.mxu0 0
        %350 = vmatpush2.bf16.msra.mxu0 0
        %351 = vmatprep.subr.bf16.mxu0 0
        %352 = vmatpush2.bf16.msra.mxu0 0
        %353 = vmatprep.subr.bf16.mxu0 0
        %354 = vmatpush2.bf16.msra.mxu0 0
        %355 = vmatprep.mubr.bf16.mxu0 0
        %356 = vmatmul.mubr.bf16.gmra.mxu0 %v321
        %v357 = vpop.f32.mrf.mxu0
        %v358 = vadd.f32 %v257, %v357
        %v359 = vpop.f32.mrf.mxu0
        %v360 = vadd.f32 %v257, %v359
        %v361 = vpop.f32.mrf.mxu0
        %v362 = vadd.f32 %v262, %v361
        %v363 = vpop.f32.mrf.mxu0
        %v364 = vadd.f32 %v262, %v363
        %365 = vdwg.mxu0
        %v366 = vmax.f32 %v358, 0.0
        %v367 = vmax.f32 %v360, 0.0
        %v368 = vmax.f32 %v362, 0.0
        %v369 = vmax.f32 %v364, 0.0
        %370 = vst [vmem:[%s236] sm:$0xff] %v366
        %371 = vst [vmem:[%s236 + $0x8] sm:$0xff] %v367
        %372 = vst [vmem:[%s236 + $0x10] sm:$0xf] %v368
        %373 = vst [vmem:[%s236 + $0x18] sm:$0xf] %v369
        %s374 = sand.u32 %s90, 1
        %s375 = sand.u32 %s90, 1
        %s376 = smul.addr %s375, 32
        %s377 = scalar_lea.vmem [#allocation3], %s376
        // Predicated region
        $region71: #{net_e_forward.2} parent=65 // pred_check
          %p378 = pneg %p100
        $region72: #{net_e_forward.2} parent=65 // pred_check_branch
          %380 = sbr.rel (%p378) target = $region74
        $region73: #{net_e_forward.2} parent=65 // pred_region
          %s381 = smul.u32 2, %s14
          %s382 = smul.addr %s381, 8
          %s383 = scalar_lea.vmem %s3, %s382
          // Predicated region
          $region75: #{net_e_forward.2} parent=73 // pred_check
            _
          $region76: #{net_e_forward.2} parent=73 // pred_check_branch
            %385 = sbr.rel (0) target = $region78
          $region77: #{net_e_forward.2} parent=73 // pred_region
            // Predicated region
            $region79: #{net_e_forward.2} parent=77 // pred_check
              _
            $region80: #{net_e_forward.2} parent=77 // pred_check_branch
              %387 = sbr.rel (0) target = $region82
            $region81: #{net_e_forward.2} parent=77 // pred_region
              loop: start=0, step=1, limit=1
              $region83: #{net_e_forward.2} parent=81 // loop_pre_header
                _
              $region84: #{net_e_forward.2} parent=81 // loop_header
                %s389 = sphi 0, %s393
                %p390 = scmp.ge.s32.totalorder %s389, 1
                %s394 = sphi %s377, %s377
                %s395 = sphi %s383, %s383
              $region85: #{net_e_forward.2} parent=81 // loop_header_branch
                %392 = sbr.rel (%p390) target = $region89
              $region86: #{net_e_forward.2} parent=81 // loop_body
                %v396 = vld [vmem:[%s394] sm:$0xff]
                %397 = vst [vmem:[%s395] sm:$0xff] %v396
                %v398 = vld [vmem:[%s394 + $0x8] sm:$0xff]
                %399 = vst [vmem:[%s395 + $0x8] sm:$0xff] %v398
                %v400 = vld [vmem:[%s394 + $0x10] sm:$0xff]
                %401 = vst [vmem:[%s395 + $0x20] sm:$0xff] %v400
                %v402 = vld [vmem:[%s394 + $0x18] sm:$0xff]
                %403 = vst [vmem:[%s395 + $0x28] sm:$0xff] %v402
              $region87: #{net_e_forward.2} parent=81 // loop_footer
                %s393 = sadd.s32 1, %s389
              $region88: #{net_e_forward.2} parent=81 // loop_footer_branch
                %388 = sbr.rel target = $region84
              $region89: #{net_e_forward.2} parent=81 // loop_exit
                _
            $region82: #{net_e_forward.2} parent=77 // pred_fallthru
              _
            // Predicated region
            $region90: #{net_e_forward.2} parent=77 // pred_check
              _
            $region91: #{net_e_forward.2} parent=77 // pred_check_branch
              %405 = sbr.rel target = $region93
            $region92: #{net_e_forward.2} parent=77 // pred_region
              _
            $region93: #{net_e_forward.2} parent=77 // pred_fallthru
              _
          $region78: #{net_e_forward.2} parent=73 // pred_fallthru
            _
          %406 = vnop
        $region74: #{net_e_forward.2} parent=65 // pred_fallthru
          _
      $region66: #{net_e_forward.2} parent=5 // pred_fallthru
        _
      %p407 = scmp.le.s32.totalorder 2, %s9
      // Predicated region
      $region94: #{net_e_forward.2} parent=5 // pred_check
        %p408 = pneg %p407
      $region95: #{net_e_forward.2} parent=5 // pred_check_branch
        %410 = sbr.rel (%p408) target = $region97
      $region96: #{net_e_forward.2} parent=5 // pred_region
        %s411 = ssub.s32 %s9, 2
        // Predicated region
        $region98: #{net_e_forward.2} parent=96 // pred_check
          %p412 = pneg %p106
        $region99: #{net_e_forward.2} parent=96 // pred_check_branch
          %414 = sbr.rel (%p412) target = $region101
        $region100: #{net_e_forward.2} parent=96 // pred_region
          %s415 = sand.u32 %s91, 1
          %s416 = sand.u32 %s91, 1
          %s417 = smul.addr %s416, 32
          %s418 = scalar_lea.vmem [#allocation3], %s417
        $region101: #{net_e_forward.2} parent=96 // pred_fallthru
          _
      $region97: #{net_e_forward.2} parent=5 // pred_fallthru
        _
    $region6: #{net_e_forward.2} parent=1 // loop_footer
      %s13 = sadd.s32 1, %s9
    $region7: #{net_e_forward.2} parent=1 // loop_footer_branch
      %8 = sbr.rel target = $region3
    $region8: #{net_e_forward.2} parent=1 // loop_exit
      _

// kernel: net_e_forward.3
$region0: #{net_e_forward.3}
  #allocation0 [shape = 'u32[]', space=smem, size = 0x4, offset = 0x4, fixed_abs, tag = 'smem constant byte address 0x4 - core index']
  #allocation1 [shape = 'u32[144,128]{1,0:T(1,128)}', space=vmem, size = 0x12000, scoped, tag = 'internal scratch']
  %s0 = inlined_call_operand.vmem [shape: bf16[288,112], index: 0, kind: input, shape index: {}]
  %s1 = inlined_call_operand.vmem [shape: bf16[112,6], index: 1, kind: input, shape index: {}]
  %s2 = inlined_call_operand.vmem [shape: f32[1,6], index: 2, kind: input, shape index: {}]
  %s3 = inlined_call_operand.vmem [shape: f32[32,6], index: 3, kind: output, shape index: {}]
  %s4 = sld [smem:[#allocation0]]
  $region45: #{net_e_forward.3} parent=0
    _
  %s6 = ssub.s32 1, %s4
  %s7 = scalar_select 0, %s6, %s4
  loop: start=0, step=1, limit=4
  $region2: #{net_e_forward.3} parent=0 // loop_pre_header
    _
  $region3: #{net_e_forward.3} parent=0 // loop_header
    %s9 = sphi 0, %s13
    %p10 = scmp.ge.s32.totalorder %s9, 4
    %s19 = sphi 0, %s21
    %s22 = sphi 0, %s19
    %s23 = sphi 0, %s22
    %s39 = sphi 0, %s23
    %s43 = sphi 0, %s43
    %s45 = sphi 0, %s43
    %s46 = sphi 0, %s45
    %s60 = sphi 0, %s46
    %s64 = sphi 0, %s64
    %s66 = sphi 0, %s64
    %s67 = sphi 0, %s66
    %s81 = sphi 0, %s67
    %s87 = sphi 0, %s89
    %s90 = sphi 0, %s87
    %s91 = sphi 0, %s90
    %s107 = sphi 0, %s91
  $region4: #{net_e_forward.3} parent=0 // loop_header_branch
    %12 = sbr.rel (%p10) target = $region8
  $region5: #{net_e_forward.3} parent=0 // loop_body
    %s14 = ssub.s32 %s9, 1
    %s15 = ssub.s32 %s9, 2
    %s16 = sadd.s32 %s9, 1
    %s17 = ssub.s32 %s9, %s16
    %p18 = scmp.eq.s32.totalorder %s17, 0
    %s20 = sadd.s32 %s19, 1
    %s21 = scalar_select %p18, %s19, %s20
    %p24 = pneg %p18
    %p25 = scmp.eq.s32.totalorder %s9, 1
    %p26 = por %p24, %p25
    %p27 = scmp.ne.s32.totalorder %s19, %s22
    %p28 = scmp.eq.s32.totalorder %s9, 0
    %p29 = por %p27, %p28
    %p30 = scmp.ne.s32.totalorder %s19, %s22
    %p31 = scmp.eq.s32.totalorder %s14, 1
    %p32 = por %p30, %p31
    %p33 = scmp.ne.s32.totalorder %s22, %s23
    %p34 = scmp.eq.s32.totalorder %s14, 0
    %p35 = por %p33, %p34
    %p36 = scmp.ne.s32.totalorder %s22, %s23
    %p37 = scmp.eq.s32.totalorder %s15, 1
    %p38 = por %p36, %p37
    %p40 = scmp.ne.s32.totalorder %s23, %s39
    %p41 = scmp.eq.s32.totalorder %s15, 0
    %p42 = por %p40, %p41
    %s44 = sadd.s32 %s43, 1
    %p47 = scmp.eq.s32.totalorder %s9, 1
    %p48 = scmp.ne.s32.totalorder %s43, %s45
    %p49 = scmp.eq.s32.totalorder %s9, 0
    %p50 = por %p48, %p49
    %p51 = scmp.ne.s32.totalorder %s43, %s45
    %p52 = scmp.eq.s32.totalorder %s14, 1
    %p53 = por %p51, %p52
    %p54 = scmp.ne.s32.totalorder %s45, %s46
    %p55 = scmp.eq.s32.totalorder %s14, 0
    %p56 = por %p54, %p55
    %p57 = scmp.ne.s32.totalorder %s45, %s46
    %p58 = scmp.eq.s32.totalorder %s15, 1
    %p59 = por %p57, %p58
    %p61 = scmp.ne.s32.totalorder %s46, %s60
    %p62 = scmp.eq.s32.totalorder %s15, 0
    %p63 = por %p61, %p62
    %s65 = sadd.s32 %s64, 1
    %p68 = scmp.eq.s32.totalorder %s9, 1
    %p69 = scmp.ne.s32.totalorder %s64, %s66
    %p70 = scmp.eq.s32.totalorder %s9, 0
    %p71 = por %p69, %p70
    %p72 = scmp.ne.s32.totalorder %s64, %s66
    %p73 = scmp.eq.s32.totalorder %s14, 1
    %p74 = por %p72, %p73
    %p75 = scmp.ne.s32.totalorder %s66, %s67
    %p76 = scmp.eq.s32.totalorder %s14, 0
    %p77 = por %p75, %p76
    %p78 = scmp.ne.s32.totalorder %s66, %s67
    %p79 = scmp.eq.s32.totalorder %s15, 1
    %p80 = por %p78, %p79
    %p82 = scmp.ne.s32.totalorder %s67, %s81
    %p83 = scmp.eq.s32.totalorder %s15, 0
    %p84 = por %p82, %p83
    %s85 = ssub.s32 %s9, %s16
    %p86 = scmp.eq.s32.totalorder %s85, 0
    %s88 = sadd.s32 %s87, 1
    %s89 = scalar_select %p86, %s87, %s88
    %p92 = pneg %p86
    %p93 = scmp.eq.s32.totalorder %s9, 1
    %p94 = por %p92, %p93
    %p95 = scmp.ne.s32.totalorder %s87, %s90
    %p96 = scmp.eq.s32.totalorder %s9, 0
    %p97 = por %p95, %p96
    %p98 = scmp.ne.s32.totalorder %s87, %s90
    %p99 = scmp.eq.s32.totalorder %s14, 1
    %p100 = por %p98, %p99
    %p101 = scmp.ne.s32.totalorder %s90, %s91
    %p102 = scmp.eq.s32.totalorder %s14, 0
    %p103 = por %p101, %p102
    %p104 = scmp.ne.s32.totalorder %s90, %s91
    %p105 = scmp.eq.s32.totalorder %s15, 1
    %p106 = por %p104, %p105
    %p108 = scmp.ne.s32.totalorder %s91, %s107
    %p109 = scmp.eq.s32.totalorder %s15, 0
    %p110 = por %p108, %p109
    %p111 = scmp.le.s32.totalorder 1, %s9
    %p112 = scmp.lt.s32.totalorder %s9, 3
    %p113 = pnand %p111, %p112
    %p114 = pneg %p113
    // Predicated region
    $region9: #{net_e_forward.3} parent=5 // pred_check
      _
    $region10: #{net_e_forward.3} parent=5 // pred_check_branch
      %116 = sbr.rel (%p113) target = $region12
    $region11: #{net_e_forward.3} parent=5 // pred_region
      %s117 = ssub.s32 %s9, 1
      // Predicated region
      $region13: #{net_e_forward.3} parent=11 // pred_check
        %p118 = pneg %p56
      $region14: #{net_e_forward.3} parent=11 // pred_check_branch
        %120 = sbr.rel (%p118) target = $region16
      $region15: #{net_e_forward.3} parent=11 // pred_region
        _
      $region16: #{net_e_forward.3} parent=11 // pred_fallthru
        _
      // Predicated region
      $region17: #{net_e_forward.3} parent=11 // pred_check
        %p121 = pneg %p77
      $region18: #{net_e_forward.3} parent=11 // pred_check_branch
        %123 = sbr.rel (%p121) target = $region20
      $region19: #{net_e_forward.3} parent=11 // pred_region
        _
      $region20: #{net_e_forward.3} parent=11 // pred_fallthru
        _
    $region12: #{net_e_forward.3} parent=5 // pred_fallthru
      _
    %p124 = scmp.lt.s32.totalorder %s9, 2
    // Predicated region
    $region21: #{net_e_forward.3} parent=5 // pred_check
      %p125 = pneg %p124
    $region22: #{net_e_forward.3} parent=5 // pred_check_branch
      %127 = sbr.rel (%p125) target = $region24
    $region23: #{net_e_forward.3} parent=5 // pred_region
      // Predicated region
      $region25: #{net_e_forward.3} parent=23 // pred_check
        %p128 = pneg %p29
      $region26: #{net_e_forward.3} parent=23 // pred_check_branch
        %130 = sbr.rel (%p128) target = $region28
      $region27: #{net_e_forward.3} parent=23 // pred_region
        %s131 = smul.u32 18, %s9
        %p132 = scmp.lt.s32.totalorder %s131, 35
        %s133 = scalar_select %p132, %s131, 35
        %s134 = smul.addr %s133, 4
        %s135 = scalar_lea.vmem %s0, %s134
        %s136 = smul.u32 18, %s9
      $region28: #{net_e_forward.3} parent=23 // pred_fallthru
        _
    $region24: #{net_e_forward.3} parent=5 // pred_fallthru
      _
    %p137 = scmp.le.s32.totalorder 1, %s9
    %p138 = scmp.lt.s32.totalorder %s9, 3
    %p139 = pnand %p137, %p138
    %p140 = pneg %p139
    // Predicated region
    $region29: #{net_e_forward.3} parent=5 // pred_check
      _
    $region30: #{net_e_forward.3} parent=5 // pred_check_branch
      %142 = sbr.rel (%p139) target = $region32
    $region31: #{net_e_forward.3} parent=5 // pred_region
      %s143 = ssub.s32 %s9, 1
      %s144 = smul.u32 18, %s14
      %p145 = scmp.lt.s32.totalorder %s144, 35
      %s146 = scalar_select %p145, %s144, 35
      %s147 = smul.addr %s146, 4
      %s148 = scalar_lea.vmem %s0, %s147
      %p149 = pneg %p35
      %p150 = pneg %p32
      %p151 = pneg %p56
      %p152 = pneg %p53
      %p153 = pneg %p77
      %p154 = pneg %p74
      %p155 = pneg %p103
      %p156 = pneg %p100
      %s157 = smul.u32 2, %s14
      %p158 = scmp.lt.s32.totalorder %s157, 3
      %s159 = scalar_select %p158, %s157, 3
      %s160 = smul.addr %s159, 8
      %s161 = scalar_lea.vmem %s3, %s160
      %s162 = smul.u32 18, %s14
      %p163 = scmp.lt.s32.totalorder %s162, 35
      %s164 = scalar_select %p163, %s162, 35
      %s165 = smul.addr %s164, 4
      %s166 = scalar_lea.vmem %s0, %s165
      %s167 = smul.u32 18, %s14
      %s168 = smul.u32 2, %s14
      %p169 = scmp.lt.s32.totalorder %s168, 3
      %s170 = scalar_select %p169, %s168, 3
      %s171 = smul.addr %s170, 8
      %s172 = scalar_lea.vmem %s3, %s171
      %s173 = smul.u32 2, %s14
      %v175 = vld [vmem:[%s166] sm:$0xf]
      %v176 = vld [vmem:[%s166 + $0x4] sm:$0xf]
      %v177 = vld [vmem:[%s166 + $0x8] sm:$0xf]
      %v178 = vld [vmem:[%s166 + $0xc] sm:$0xf]
      %v179 = vld [vmem:[%s166 + $0x10] sm:$0xf]
      %v180 = vld [vmem:[%s166 + $0x14] sm:$0xf]
      %v181 = vld [vmem:[%s166 + $0x18] sm:$0xf]
      %v182 = vld [vmem:[%s166 + $0x1c] sm:$0xf]
      %v183 = vld [vmem:[%s166 + $0x20] sm:$0xf]
      %v184 = vld [vmem:[%s166 + $0x24] sm:$0xf]
      %v185 = vld [vmem:[%s166 + $0x28] sm:$0xf]
      %v186 = vld [vmem:[%s166 + $0x2c] sm:$0xf]
      %v187 = vld [vmem:[%s166 + $0x30] sm:$0xf]
      %v188 = vld [vmem:[%s166 + $0x34] sm:$0xf]
      %v189 = vld [vmem:[%s166 + $0x38] sm:$0xf]
      %v190 = vld [vmem:[%s166 + $0x3c] sm:$0xf]
      %v191 = vld [vmem:[%s166 + $0x40] sm:$0xf]
      %v192 = vld [vmem:[%s166 + $0x44] sm:$0xf]
      %v193 = vld [vmem:[%s1] sm:$0xf]
      %v194 = vld [vmem:[%s1 + $0x4] sm:$0xf]
      %v195 = vld [vmem:[%s1 + $0x8] sm:$0xf]
      %v196 = vld [vmem:[%s1 + $0xc] sm:$0xf]
      %v197 = vld [vmem:[%s1 + $0x10] sm:$0xf]
      %v198 = vld [vmem:[%s1 + $0x14] sm:$0xf]
      %v199 = vld [vmem:[%s1 + $0x18] sm:$0xf]
      %v200 = vld [vmem:[%s1 + $0x1c] sm:$0xf]
      %v201 = vld [vmem:[%s1 + $0x20] sm:$0xf]
      %v202 = vld [vmem:[%s1 + $0x24] sm:$0xf]
      %v203 = vld [vmem:[%s1 + $0x28] sm:$0xf]
      %v204 = vld [vmem:[%s1 + $0x2c] sm:$0xf]
      %v205 = vld [vmem:[%s1 + $0x30] sm:$0xf]
      %v206 = vld [vmem:[%s1 + $0x34] sm:$0xf]
      %v207 = vld [vmem:[%s2] sm:$0x1]
      %v209 = vlaneseq
      %v210 = vshrl.u32 %v209, 7
      %v211 = vsub.s32 0, %v210
      %v212 = vrot.slane %v207, %v211
      %v232 = vunpack.c.l.b16 %v175
      %v233 = vunpack.c.l.b16 %v176
      %v234 = vunpack.c.l.b16 %v177
      %v235 = vunpack.c.l.b16 %v178
      %v236 = vunpack.c.l.b16 %v179
      %v237 = vunpack.c.l.b16 %v180
      %v238 = vunpack.c.l.b16 %v181
      %v239 = vunpack.c.l.b16 %v182
      %v240 = vunpack.c.l.b16 %v183
      %v241 = vunpack.c.l.b16 %v184
      %v242 = vunpack.c.l.b16 %v185
      %v243 = vunpack.c.l.b16 %v186
      %v244 = vunpack.c.l.b16 %v187
      %v245 = vunpack.c.l.b16 %v188
      %v246 = vunpack.c.l.b16 %v189
      %v247 = vunpack.c.l.b16 %v190
      %v248 = vunpack.c.l.b16 %v191
      %v249 = vunpack.c.l.b16 %v192
      %v250 = vpack.c.b16 %v233, %v232
      %v251 = vpack.c.b16 %v235, %v234
      %v252 = vpack.c.b16 %v237, %v236
      %v253 = vpack.c.b16 %v239, %v238
      %v254 = vpack.c.b16 %v241, %v240
      %v255 = vpack.c.b16 %v243, %v242
      %v256 = vpack.c.b16 %v245, %v244
      %v257 = vpack.c.b16 %v247, %v246
      %v258 = vpack.c.b16 %v249, %v248
      %v273 = vunpack.c.l.b16 %v193
      %v274 = vunpack.c.l.b16 %v194
      %v275 = vunpack.c.l.b16 %v195
      %v276 = vunpack.c.l.b16 %v196
      %v277 = vunpack.c.l.b16 %v197
      %v278 = vunpack.c.l.b16 %v198
      %v279 = vunpack.c.l.b16 %v199
      %v280 = vunpack.c.l.b16 %v200
      %v281 = vunpack.c.l.b16 %v201
      %v282 = vunpack.c.l.b16 %v202
      %v283 = vunpack.c.l.b16 %v203
      %v284 = vunpack.c.l.b16 %v204
      %v285 = vunpack.c.l.b16 %v205
      %v286 = vunpack.c.l.b16 %v206
      %v287 = vpack.c.b16 %v274, %v273
      %v288 = vpack.c.b16 %v276, %v275
      %v289 = vpack.c.b16 %v278, %v277
      %v290 = vpack.c.b16 %v280, %v279
      %v291 = vpack.c.b16 %v282, %v281
      %v292 = vpack.c.b16 %v284, %v283
      %v293 = vpack.c.b16 %v286, %v285
      %vm301 = vcmask 916480
      %v303 = vsel %vm301, %v250, 0
      %v306 = vsel %vm301, %v251, 0
      %v309 = vsel %vm301, %v252, 0
      %v312 = vsel %vm301, %v253, 0
      %v315 = vsel %vm301, %v254, 0
      %v318 = vsel %vm301, %v255, 0
      %v321 = vsel %vm301, %v256, 0
      %v324 = vsel %vm301, %v257, 0
      %v327 = vsel %vm301, %v258, 0
      %329 = vmatprep.subr.bf16.mxu0 0
      %330 = vmatpush1.bf16.msra.mxu0 0
      %331 = vmatprep.subr.bf16.mxu0 0
      %332 = vmatpush1.bf16.msra.mxu0 %v293
      %333 = vmatprep.subr.bf16.mxu0 0
      %334 = vmatpush1.bf16.msra.mxu0 %v292
      %335 = vmatprep.subr.bf16.mxu0 0
      %336 = vmatpush1.bf16.msra.mxu0 %v291
      %337 = vmatprep.subr.bf16.mxu0 0
      %338 = vmatpush1.bf16.msra.mxu0 %v290
      %339 = vmatprep.subr.bf16.mxu0 0
      %340 = vmatpush1.bf16.msra.mxu0 %v289
      %341 = vmatprep.subr.bf16.mxu0 0
      %342 = vmatpush1.bf16.msra.mxu0 %v288
      %343 = vmatprep.subr.bf16.mxu0 0
      %344 = vmatpush1.bf16.msra.mxu0 %v287
      %345 = vmatprep.subr.bf16.mxu0 0
      %346 = vmatpush2.bf16.msra.mxu0 0
      %347 = vmatprep.subr.bf16.mxu0 0
      %348 = vmatpush2.bf16.msra.mxu0 0
      %349 = vmatprep.subr.bf16.mxu0 0
      %350 = vmatpush2.bf16.msra.mxu0 0
      %351 = vmatprep.subr.bf16.mxu0 0
      %352 = vmatpush2.bf16.msra.mxu0 0
      %353 = vmatprep.subr.bf16.mxu0 0
      %354 = vmatpush2.bf16.msra.mxu0 0
      %355 = vmatprep.subr.bf16.mxu0 0
      %356 = vmatpush2.bf16.msra.mxu0 0
      %357 = vmatprep.subr.bf16.mxu0 0
      %358 = vmatpush2.bf16.msra.mxu0 0
      %359 = vmatprep.subr.bf16.mxu0 0
      %360 = vmatpush2.bf16.msra.mxu0 0
      %361 = vmatprep.mubr.bf16.mxu0 0
      %362 = vmatmul.mubr.bf16.gmra.mxu0 %v303
      %v363 = vpop.f32.mrf.mxu0
      %v364 = vadd.f32 %v212, %v363
      %v365 = vpop.f32.mrf.mxu0
      %v366 = vpop.f32.mrf.mxu0
      %v367 = vadd.f32 %v212, %v366
      %v368 = vpop.f32.mrf.mxu0
      %369 = vmatprep.mubr.bf16.mxu0 0
      %370 = vmatmul.mubr.bf16.gmra.mxu0 %v306
      %v371 = vpop.f32.mrf.mxu0
      %v372 = vadd.f32 %v212, %v371
      %v373 = vpop.f32.mrf.mxu0
      %v374 = vpop.f32.mrf.mxu0
      %v375 = vadd.f32 %v212, %v374
      %v376 = vpop.f32.mrf.mxu0
      %377 = vmatprep.mubr.bf16.mxu0 0
      %378 = vmatmul.mubr.bf16.gmra.mxu0 %v309
      %v379 = vpop.f32.mrf.mxu0
      %v380 = vadd.f32 %v212, %v379
      %v381 = vpop.f32.mrf.mxu0
      %v382 = vpop.f32.mrf.mxu0
      %v383 = vadd.f32 %v212, %v382
      %v384 = vpop.f32.mrf.mxu0
      %385 = vmatprep.mubr.bf16.mxu0 0
      %386 = vmatmul.mubr.bf16.gmra.mxu0 %v312
      %v387 = vpop.f32.mrf.mxu0
      %v388 = vadd.f32 %v212, %v387
      %v389 = vpop.f32.mrf.mxu0
      %v390 = vpop.f32.mrf.mxu0
      %v391 = vadd.f32 %v212, %v390
      %v392 = vpop.f32.mrf.mxu0
      %393 = vmatprep.mubr.bf16.mxu0 0
      %394 = vmatmul.mubr.bf16.gmra.mxu0 %v315
      %v395 = vpop.f32.mrf.mxu0
      %v396 = vadd.f32 %v212, %v395
      %v397 = vpop.f32.mrf.mxu0
      %v398 = vpop.f32.mrf.mxu0
      %v399 = vadd.f32 %v212, %v398
      %v400 = vpop.f32.mrf.mxu0
      %401 = vmatprep.mubr.bf16.mxu0 0
      %402 = vmatmul.mubr.bf16.gmra.mxu0 %v318
      %v403 = vpop.f32.mrf.mxu0
      %v404 = vadd.f32 %v212, %v403
      %v405 = vpop.f32.mrf.mxu0
      %v406 = vpop.f32.mrf.mxu0
      %v407 = vadd.f32 %v212, %v406
      %v408 = vpop.f32.mrf.mxu0
      %409 = vmatprep.mubr.bf16.mxu0 0
      %410 = vmatmul.mubr.bf16.gmra.mxu0 %v321
      %v411 = vpop.f32.mrf.mxu0
      %v412 = vadd.f32 %v212, %v411
      %v413 = vpop.f32.mrf.mxu0
      %v414 = vpop.f32.mrf.mxu0
      %v415 = vadd.f32 %v212, %v414
      %v416 = vpop.f32.mrf.mxu0
      %417 = vmatprep.mubr.bf16.mxu0 0
      %418 = vmatmul.mubr.bf16.gmra.mxu0 %v324
      %v419 = vpop.f32.mrf.mxu0
      %v420 = vadd.f32 %v212, %v419
      %v421 = vpop.f32.mrf.mxu0
      %v422 = vpop.f32.mrf.mxu0
      %v423 = vadd.f32 %v212, %v422
      %v424 = vpop.f32.mrf.mxu0
      %425 = vmatprep.mubr.bf16.mxu0 0
      %426 = vmatmul.mubr.bf16.gmra.mxu0 %v327
      %v427 = vpop.f32.mrf.mxu0
      %v428 = vadd.f32 %v212, %v427
      %v429 = vpop.f32.mrf.mxu0
      %v430 = vpop.f32.mrf.mxu0
      %v431 = vadd.f32 %v212, %v430
      %v432 = vpop.f32.mrf.mxu0
      %433 = vdwg.mxu0
      %v434 = vmax.f32 %v364, 0.0
      %v435 = vmax.f32 %v367, 0.0
      %v436 = vmax.f32 %v372, 0.0
      %v437 = vmax.f32 %v375, 0.0
      %v438 = vmax.f32 %v380, 0.0
      %v439 = vmax.f32 %v383, 0.0
      %v440 = vmax.f32 %v388, 0.0
      %v441 = vmax.f32 %v391, 0.0
      %v442 = vmax.f32 %v396, 0.0
      %v443 = vmax.f32 %v399, 0.0
      %v444 = vmax.f32 %v404, 0.0
      %v445 = vmax.f32 %v407, 0.0
      %v446 = vmax.f32 %v412, 0.0
      %v447 = vmax.f32 %v415, 0.0
      %v448 = vmax.f32 %v420, 0.0
      %v449 = vmax.f32 %v423, 0.0
      %v450 = vmax.f32 %v428, 0.0
      %v451 = vmax.f32 %v431, 0.0
      %v452 = vmax.f32 %v434, %v436
      %v453 = vmax.f32 %v435, %v437
      %v454 = vmax.f32 %v452, %v438
      %v455 = vmax.f32 %v453, %v439
      %v456 = vmax.f32 %v454, %v440
      %v457 = vmax.f32 %v455, %v441
      %v458 = vmax.f32 %v456, %v442
      %v459 = vmax.f32 %v457, %v443
      %v460 = vmax.f32 %v458, %v444
      %v461 = vmax.f32 %v459, %v445
      %v462 = vmax.f32 %v460, %v446
      %v463 = vmax.f32 %v461, %v447
      %v464 = vmax.f32 %v462, %v448
      %v465 = vmax.f32 %v463, %v449
      %v466 = vmax.f32 %v464, %v450
      %v467 = vmax.f32 %v465, %v451
      %vm468 = vcmask 48128
      %469 = vst.msk [vmem:[%s172] sm:$0xff] %vm468, %v466
      %470 = vst.msk [vmem:[%s172 + $0x8] sm:$0xff] %vm468, %v467
      %s471 = smul.u32 2, %s14
      %p472 = scmp.lt.s32.totalorder %s471, 3
      %s473 = scalar_select %p472, %s471, 3
      %s474 = smul.addr %s473, 8
      %s475 = scalar_lea.vmem %s3, %s474
      // Predicated region
      $region33: #{net_e_forward.3} parent=31 // pred_check
        %p476 = pneg %p100
      $region34: #{net_e_forward.3} parent=31 // pred_check_branch
        %478 = sbr.rel (%p476) target = $region36
      $region35: #{net_e_forward.3} parent=31 // pred_region
        %s479 = smul.u32 2, %s14
      $region36: #{net_e_forward.3} parent=31 // pred_fallthru
        _
    $region32: #{net_e_forward.3} parent=5 // pred_fallthru
      _
    %p480 = scmp.le.s32.totalorder 2, %s9
    // Predicated region
    $region37: #{net_e_forward.3} parent=5 // pred_check
      %p481 = pneg %p480
    $region38: #{net_e_forward.3} parent=5 // pred_check_branch
      %483 = sbr.rel (%p481) target = $region40
    $region39: #{net_e_forward.3} parent=5 // pred_region
      %s484 = ssub.s32 %s9, 2
      // Predicated region
      $region41: #{net_e_forward.3} parent=39 // pred_check
        %p485 = pneg %p106
      $region42: #{net_e_forward.3} parent=39 // pred_check_branch
        %487 = sbr.rel (%p485) target = $region44
      $region43: #{net_e_forward.3} parent=39 // pred_region
        %s488 = smul.u32 2, %s15
        %p489 = scmp.lt.s32.totalorder %s488, 3
        %s490 = scalar_select %p489, %s488, 3
        %s491 = smul.addr %s490, 8
        %s492 = scalar_lea.vmem %s3, %s491
      $region44: #{net_e_forward.3} parent=39 // pred_fallthru
        _
    $region40: #{net_e_forward.3} parent=5 // pred_fallthru
      _
  $region6: #{net_e_forward.3} parent=0 // loop_footer
    %s13 = sadd.s32 1, %s9
  $region7: #{net_e_forward.3} parent=0 // loop_footer_branch
    %8 = sbr.rel target = $region3
  $region8: #{net_e_forward.3} parent=0 // loop_exit
    _

</llo_original>
